<compile_context>
chip_gen: v5e
topology: v5e:2x2
jax: 0.10.0
libtpu: 0.0.40
codegen_flags: <defaults>
</compile_context>

<pallas_src>
import math

import jax
import jax.numpy as jnp
from jax.experimental import pallas as pl
from jax.experimental.pallas import tpu as pltpu


def _round_up(a: int, b: int) -> int:
    return ((a + b - 1) // b) * b


# ---------------------------------------------------------------------------
# In-kernel exact GELU (matches torch.nn.functional.gelu, approximate='none').
# ---------------------------------------------------------------------------
_ERF_P = 0.3275911
_ERF_A1 = 0.254829592
_ERF_A2 = -0.284496736
_ERF_A3 = 1.421413741
_ERF_A4 = -1.453152027
_ERF_A5 = 1.061405429
_INV_SQRT2 = 0.7071067811865476


def _erf(x, *, approx_recip):
    # Abramowitz & Stegun 7.1.26 polynomial approximation, |error| < 1.5e-7.
    sign = jnp.where(x >= 0.0, 1.0, -1.0)
    z = jnp.abs(x)
    denom = 1.0 + _ERF_P * z
    if approx_recip:
        # EUP slot (shares the unit with exp, frees the VALU — v5e item).
        t = pl.reciprocal(denom, approx=True)
    else:
        t = 1.0 / denom
    poly = ((((_ERF_A5 * t + _ERF_A4) * t + _ERF_A3) * t + _ERF_A2) * t
            + _ERF_A1) * t
    return sign * (1.0 - poly * jnp.exp(-z * z))


def _gelu_exact(x, *, approx_recip):
    return 0.5 * x * (1.0 + _erf(x * _INV_SQRT2, approx_recip=approx_recip))


# ---------------------------------------------------------------------------
# Kernel: one (row tile, hidden tile) step of Linear -> GEGLU -> Linear.
# ---------------------------------------------------------------------------
def _feedforward_kernel(x_ref, w1a_ref, w1g_ref, b1a_ref, b1g_ref,
                        w2_ref, b2_ref, o_ref, acc_ref):
    h_idx = pl.program_id(1)

    @pl.when(h_idx == 0)
    def _init():
        # Start the second-Linear accumulator from its bias.
        acc_ref[...] = jnp.broadcast_to(b2_ref[...], acc_ref.shape)

    compute_dtype = w1a_ref.dtype
    approx_recip = jnp.dtype(compute_dtype).itemsize < 4

    # Cast x to the MXU compute dtype in-kernel (no wrapper-side HBM pass).
    x = x_ref[...].astype(compute_dtype)                     # (tm, dim)

    # First Linear, pre-split into value / gate halves (GEGLU chunk is free).
    a = jnp.dot(x, w1a_ref[...],
                preferred_element_type=jnp.float32) + b1a_ref[...]
    g = jnp.dot(x, w1g_ref[...],
                preferred_element_type=jnp.float32) + b1g_ref[...]
    h = a * _gelu_exact(g, approx_recip=approx_recip)        # (tm, tn_h) f32

    # Second Linear: accumulate this hidden chunk's contribution in f32.
    acc_ref[...] += jnp.dot(h.astype(w2_ref.dtype), w2_ref[...],
                            preferred_element_type=jnp.float32)

    @pl.when(h_idx == pl.num_programs(1) - 1)
    def _finalize():
        o_ref[...] = acc_ref[...].astype(o_ref.dtype)


# ---------------------------------------------------------------------------
# Tiling / VMEM-budget helpers.
# ---------------------------------------------------------------------------
def _vmem_capacity_bytes() -> int:
    try:
        return int(pltpu.get_tpu_info().vmem_capacity_bytes)
    except Exception:
        return 64 * 1024 * 1024        # conservative (v7x per-core VMEM)


def _choose_row_tile(m: int, max_tile: int) -> int:
    max_tile = max(16, _round_up(max_tile, 16))
    if m <= max_tile:
        tm = _round_up(max(m, 1), 16)          # 16-row bf16 sublane pack
        if m >= 32 and m % 32 == 0:
            tm //= 2                           # >=2 steps -> both v7x TCs busy
        return tm
    for cand in (512, 384, 256, 128):          # MXU-friendly, divide m exactly
        if cand <= max_tile and m % cand == 0:
            return cand
    return max_tile


def _choose_hidden_tile(hidden: int, per_col_bytes: int, fixed_bytes: int,
                        budget_bytes: int) -> int:
    # Candidates: hidden itself, plus every multiple of 128 that divides it
    # (keeps every block lane-aligned and avoids partial reduction blocks).
    cands = {hidden}
    for c in range(128, hidden, 128):
        if hidden % c == 0:
            cands.add(c)
    for c in sorted(cands, reverse=True):
        if fixed_bytes + per_col_bytes * c <= budget_bytes:
            return c
    return min(cands)                          # best effort


# ---------------------------------------------------------------------------
# Wrapper: PyTorch-layout params in, same-shape output out.
# ---------------------------------------------------------------------------
def feed_forward(x, w1, b1, w2, b2, *, compute_dtype=jnp.bfloat16,
                 row_tile=512):
    """Pallas TPU equivalent of FeedForward.forward.

    x : (..., dim)
    w1: (dim*mult*2, dim),  b1: (dim*mult*2,)   -- first nn.Linear (torch layout)
    w2: (dim, dim*mult),    b2: (dim,)          -- second nn.Linear
    compute_dtype: MXU input dtype (bf16 default; accumulation is always f32).
    """
    orig_shape = x.shape
    dim = orig_shape[-1]
    two_hidden, dim_in = w1.shape
    assert dim_in == dim and two_hidden % 2 == 0, (w1.shape, dim)
    hidden = two_hidden // 2
    assert w2.shape == (dim, hidden), w2.shape
    assert b1.shape == (two_hidden,) and b2.shape == (dim,)

    if compute_dtype is None:
        compute_dtype = x.dtype

    # Lane-dense (K, N) weights; GEGLU chunk done here (value = rows [:hidden]
    # of w1, gate = rows [hidden:]) so the kernel never slices across lanes.
    w1a = jnp.asarray(w1[:hidden].T, dtype=compute_dtype)     # (dim, hidden)
    w1g = jnp.asarray(w1[hidden:].T, dtype=compute_dtype)     # (dim, hidden)
    w2t = jnp.asarray(w2.T, dtype=compute_dtype)              # (hidden, dim)
    b1a = jnp.asarray(b1[:hidden], dtype=jnp.float32).reshape(1, hidden)
    b1g = jnp.asarray(b1[hidden:], dtype=jnp.float32).reshape(1, hidden)
    b2r = jnp.asarray(b2, dtype=jnp.float32).reshape(1, dim)

    # Flatten leading dims into the matmul M axis; x keeps its original dtype
    # (cast happens in-kernel), padded only when the tile does not divide m.
    m = math.prod(orig_shape[:-1]) if len(orig_shape) > 1 else 1
    tm = _choose_row_tile(m, row_tile)
    m_pad = _round_up(m, tm)
    x2 = x.reshape(m, dim)
    if m_pad != m:
        x2 = jnp.pad(x2, ((0, m_pad - m), (0, 0)))
    n_m = m_pad // tm

    csize = jnp.dtype(compute_dtype).itemsize
    xsize = jnp.dtype(x.dtype).itemsize

    # Explicit VMEM budget: choose the hidden tile so that everything that is
    # resident per grid step fits, then set vmem_limit_bytes accordingly.
    vmem_limit = max(min(100 * 2**20, int(_vmem_capacity_bytes() * 0.85)),
                     16 * 2**20)
    budget = int(vmem_limit * 0.9)
    fixed = (2 * tm * dim * xsize          # x tile, double-buffered
             + 2 * tm * dim * xsize        # out tile, double-buffered
             + tm * dim * 4                # f32 accumulator scratch
             + 2 * dim * 4                 # b2
             + (2 << 20))                  # misc headroom
    per_col = (2 * 3 * dim * csize         # w1a + w1g + w2t, double-buffered
               + 2 * 2 * 4                 # b1 halves
               + 3 * tm * 4)               # a / g / h f32 intermediates
    tn_h = _choose_hidden_tile(hidden, per_col, fixed, budget)
    n_h = hidden // tn_h

    cost = pl.CostEstimate(
        flops=2 * m_pad * dim * (2 * hidden)     # first Linear (both halves)
              + 2 * m_pad * hidden * dim         # second Linear
              + 8 * m_pad * hidden,              # GEGLU elementwise
        transcendentals=m_pad * hidden,          # exp() inside erf
        bytes_accessed=(2 * m_pad * dim * xsize                       # x + out
                        + (n_m if n_h > 1 else 1)
                        * 3 * dim * hidden * csize                    # weights
                        + (2 * hidden + dim) * 4),                    # biases
    )

    out = pl.pallas_call(
        _feedforward_kernel,
        out_shape=jax.ShapeDtypeStruct((m_pad, dim), x.dtype),
        grid_spec=pltpu.PrefetchScalarGridSpec(
            num_scalar_prefetch=0,
            grid=(n_m, n_h),
            in_specs=[
                pl.BlockSpec((tm, dim), lambda i, h: (i, 0)),      # x rows
                pl.BlockSpec((dim, tn_h), lambda i, h: (0, h)),    # W1 (value)
                pl.BlockSpec((dim, tn_h), lambda i, h: (0, h)),    # W1 (gate)
                pl.BlockSpec((1, tn_h), lambda i, h: (0, h)),      # b1 (value)
                pl.BlockSpec((1, tn_h), lambda i, h: (0, h)),      # b1 (gate)
                pl.BlockSpec((tn_h, dim), lambda i, h: (h, 0)),    # W2
                pl.BlockSpec((1, dim), lambda i, h: (0, 0)),       # b2
            ],
            out_specs=pl.BlockSpec((tm, dim), lambda i, h: (i, 0)),
            scratch_shapes=[pltpu.VMEM((tm, dim), jnp.float32)],
        ),
        compiler_params=pltpu.CompilerParams(
            dimension_semantics=("parallel", "arbitrary"),
            vmem_limit_bytes=vmem_limit),
        cost_estimate=cost,
    )(x2, w1a, w1g, b1a, b1g, w2t, b2r)

    if m_pad != m:
        out = out[:m]
    return out.reshape(orig_shape)


# ---------------------------------------------------------------------------
if __name__ == "__main__":
    key = jax.random.PRNGKey(0)
    k_x, k_w1, k_b1, k_w2, k_b2 = jax.random.split(key, 5)

    # FeedForward(dim=32, mult=4): Linear(32, 256) -> GEGLU -> Linear(128, 32)
    batch, seq, dim, mult = 2, 8, 32, 4
    hidden = dim * mult

    x = jax.random.normal(k_x, (batch, seq, dim), dtype=jnp.float32)

    # Deterministic synthetic params matching nn.Linear's default init ranges.
    lim1 = 1.0 / math.sqrt(dim)
    lim2 = 1.0 / math.sqrt(hidden)
    w1 = jax.random.uniform(k_w1, (2 * hidden, dim), jnp.float32, -lim1, lim1)
    b1 = jax.random.uniform(k_b1, (2 * hidden,), jnp.float32, -lim1, lim1)
    w2 = jax.random.uniform(k_w2, (dim, hidden), jnp.float32, -lim2, lim2)
    b2 = jax.random.uniform(k_b2, (dim,), jnp.float32, -lim2, lim2)

    # Pure-JAX reference (exact erf GELU, same as torch.nn.functional.gelu).
    def reference(x):
        h = x @ w1.T + b1
        a, g = jnp.split(h, 2, axis=-1)
        y = a * jax.nn.gelu(g, approximate=False)
        return y @ w2.T + b2

    ref = reference(x)

    # f32 MXU path: exact divide in erf -> must match reference tightly.
    y32 = jax.block_until_ready(
        feed_forward(x, w1, b1, w2, b2, compute_dtype=jnp.float32))
    assert y32.shape == x.shape, y32.shape
    assert jnp.allclose(y32, ref, atol=1e-4, rtol=1e-4), \
        float(jnp.max(jnp.abs(y32 - ref)))

    # Default bf16-input path (f32 accumulation, EUP reciprocal): looser tol.
    y16 = jax.block_until_ready(feed_forward(x, w1, b1, w2, b2))
    assert y16.shape == x.shape, y16.shape
    assert jnp.allclose(y16, ref, atol=1e-1, rtol=1e-1), \
        float(jnp.max(jnp.abs(y16 - ref)))

    print("KERNEL_OK")
</pallas_src>

<mosaic_0001>
module attributes {stable_mosaic.version = 11 : i64} {
  func.func @_feedforward_kernel(%arg0: i32, %arg1: i32, %arg2: memref<16x32xf32, #tpu.memory_space<vmem>>, %arg3: memref<32x128xf32, #tpu.memory_space<vmem>>, %arg4: memref<32x128xf32, #tpu.memory_space<vmem>>, %arg5: memref<1x128xf32, #tpu.memory_space<vmem>>, %arg6: memref<1x128xf32, #tpu.memory_space<vmem>>, %arg7: memref<128x32xf32, #tpu.memory_space<vmem>>, %arg8: memref<1x32xf32, #tpu.memory_space<vmem>>, %arg9: memref<16x32xf32, #tpu.memory_space<vmem>>, %arg10: memref<16x32xf32, #tpu.memory_space<vmem>>) attributes {dimension_semantics = [#tpu.dimension_semantics<parallel>, #tpu.dimension_semantics<arbitrary>], iteration_bounds = array<i64: 1, 1>, scalar_prefetch = 0 : i64, scratch_operands = 1 : i64, tpu.core_type = #tpu.core_type<tc>, window_params = [{transform_indices = @transform_0, window_bounds = array<i64: 16, 32>}, {transform_indices = @transform_1, window_bounds = array<i64: 32, 128>}, {transform_indices = @transform_2, window_bounds = array<i64: 32, 128>}, {transform_indices = @transform_3, window_bounds = array<i64: 1, 128>}, {transform_indices = @transform_4, window_bounds = array<i64: 1, 128>}, {transform_indices = @transform_5, window_bounds = array<i64: 128, 32>}, {pipeline_mode = #tpu.pipeline_mode<synchronous>, transform_indices = @transform_6, window_bounds = array<i64: 1, 32>}, {transform_indices = @transform_7, window_bounds = array<i64: 16, 32>}]} {
    %c0_i32 = arith.constant 0 : i32
    %0 = arith.cmpi eq, %arg1, %c0_i32 : i32
    %1 = arith.extui %0 : i1 to i32
    %c0_i32_0 = arith.constant 0 : i32
    %2 = arith.cmpi ne, %1, %c0_i32_0 : i32
    scf.if %2 {
      %c0_36 = arith.constant 0 : index
      %c0_37 = arith.constant 0 : index
      %64 = vector.load %arg8[%c0_36, %c0_37] : memref<1x32xf32, #tpu.memory_space<vmem>>, vector<1x32xf32>
      %65 = vector.shape_cast %64 : vector<1x32xf32> to vector<1x32xf32>
      %66 = vector.broadcast %65 : vector<1x32xf32> to vector<16x32xf32>
      %c0_38 = arith.constant 0 : index
      %c0_39 = arith.constant 0 : index
      %67 = vector.load %arg10[%c0_38, %c0_39] : memref<16x32xf32, #tpu.memory_space<vmem>>, vector<16x32xf32>
      tpu.vector_store %arg10[%c0_38, %c0_39], %66 {strides = array<i32>} : memref<16x32xf32, #tpu.memory_space<vmem>>, vector<16x32xf32>,
    } else {
    }
    %c0 = arith.constant 0 : index
    %c0_1 = arith.constant 0 : index
    %3 = vector.load %arg2[%c0, %c0_1] : memref<16x32xf32, #tpu.memory_space<vmem>>, vector<16x32xf32>
    %c0_2 = arith.constant 0 : index
    %c0_3 = arith.constant 0 : index
    %4 = vector.load %arg3[%c0_2, %c0_3] : memref<32x128xf32, #tpu.memory_space<vmem>>, vector<32x128xf32>
    %cst = arith.constant dense<0.000000e+00> : vector<16x128xf32>
    %5 = tpu.matmul %3, %4, %cst {dimension_numbers = #tpu.dot_dimension_numbers<[1], [0], [0], [1], [0, 0, 1, 1], [], []>} : vector<16x32xf32>, vector<32x128xf32>, vector<16x128xf32> -> vector<16x128xf32>
    %c0_4 = arith.constant 0 : index
    %c0_5 = arith.constant 0 : index
    %6 = vector.load %arg5[%c0_4, %c0_5] : memref<1x128xf32, #tpu.memory_space<vmem>>, vector<1x128xf32>
    %7 = vector.broadcast %6 : vector<1x128xf32> to vector<16x128xf32>
    %8 = arith.addf %5, %7 : vector<16x128xf32>
    %c0_6 = arith.constant 0 : index
    %c0_7 = arith.constant 0 : index
    %9 = vector.load %arg4[%c0_6, %c0_7] : memref<32x128xf32, #tpu.memory_space<vmem>>, vector<32x128xf32>
    %cst_8 = arith.constant dense<0.000000e+00> : vector<16x128xf32>
    %10 = tpu.matmul %3, %9, %cst_8 {dimension_numbers = #tpu.dot_dimension_numbers<[1], [0], [0], [1], [0, 0, 1, 1], [], []>} : vector<16x32xf32>, vector<32x128xf32>, vector<16x128xf32> -> vector<16x128xf32>
    %c0_9 = arith.constant 0 : index
    %c0_10 = arith.constant 0 : index
    %11 = vector.load %arg6[%c0_9, %c0_10] : memref<1x128xf32, #tpu.memory_space<vmem>>, vector<1x128xf32>
    %12 = vector.broadcast %11 : vector<1x128xf32> to vector<16x128xf32>
    %13 = arith.addf %10, %12 : vector<16x128xf32>
    %cst_11 = arith.constant 5.000000e-01 : f32
    %14 = vector.broadcast %cst_11 : f32 to vector<16x128xf32>
    %15 = arith.mulf %14, %13 : vector<16x128xf32>
    %cst_12 = arith.constant 0.707106769 : f32
    %16 = vector.broadcast %cst_12 : f32 to vector<16x128xf32>
    %17 = arith.mulf %13, %16 : vector<16x128xf32>
    %cst_13 = arith.constant 0.000000e+00 : f32
    %18 = vector.broadcast %cst_13 : f32 to vector<16x128xf32>
    %19 = arith.cmpf oge, %17, %18 : vector<16x128xf32>
    %cst_14 = arith.constant 1.000000e+00 : f32
    %cst_15 = arith.constant -1.000000e+00 : f32
    %20 = vector.broadcast %cst_14 : f32 to vector<16x128xf32>
    %21 = vector.broadcast %cst_15 : f32 to vector<16x128xf32>
    %22 = arith.select %19, %20, %21 : vector<16x128xi1>, vector<16x128xf32>
    %23 = math.absf %17 : vector<16x128xf32>
    %cst_16 = arith.constant 0.327591091 : f32
    %24 = vector.broadcast %cst_16 : f32 to vector<16x128xf32>
    %25 = arith.mulf %24, %23 : vector<16x128xf32>
    %cst_17 = arith.constant 1.000000e+00 : f32
    %26 = vector.broadcast %cst_17 : f32 to vector<16x128xf32>
    %27 = arith.addf %26, %25 : vector<16x128xf32>
    %cst_18 = arith.constant 1.000000e+00 : f32
    %28 = vector.broadcast %cst_18 : f32 to vector<16x128xf32>
    %29 = arith.divf %28, %27 : vector<16x128xf32>
    %cst_19 = arith.constant 1.06140542 : f32
    %30 = vector.broadcast %cst_19 : f32 to vector<16x128xf32>
    %31 = arith.mulf %30, %29 : vector<16x128xf32>
    %cst_20 = arith.constant -1.45315206 : f32
    %32 = vector.broadcast %cst_20 : f32 to vector<16x128xf32>
    %33 = arith.addf %31, %32 : vector<16x128xf32>
    %34 = arith.mulf %33, %29 : vector<16x128xf32>
    %cst_21 = arith.constant 1.42141378 : f32
    %35 = vector.broadcast %cst_21 : f32 to vector<16x128xf32>
    %36 = arith.addf %34, %35 : vector<16x128xf32>
    %37 = arith.mulf %36, %29 : vector<16x128xf32>
    %cst_22 = arith.constant -0.284496725 : f32
    %38 = vector.broadcast %cst_22 : f32 to vector<16x128xf32>
    %39 = arith.addf %37, %38 : vector<16x128xf32>
    %40 = arith.mulf %39, %29 : vector<16x128xf32>
    %cst_23 = arith.constant 0.254829586 : f32
    %41 = vector.broadcast %cst_23 : f32 to vector<16x128xf32>
    %42 = arith.addf %40, %41 : vector<16x128xf32>
    %43 = arith.mulf %42, %29 : vector<16x128xf32>
    %cst_24 = arith.constant 0.000000e+00 : f32
    %44 = vector.broadcast %cst_24 : f32 to vector<16x128xf32>
    %45 = arith.subf %44, %23 : vector<16x128xf32>
    %46 = arith.mulf %45, %23 : vector<16x128xf32>
    %47 = math.exp %46 : vector<16x128xf32>
    %48 = arith.mulf %43, %47 : vector<16x128xf32>
    %cst_25 = arith.constant 1.000000e+00 : f32
    %49 = vector.broadcast %cst_25 : f32 to vector<16x128xf32>
    %50 = arith.subf %49, %48 : vector<16x128xf32>
    %51 = arith.mulf %22, %50 : vector<16x128xf32>
    %cst_26 = arith.constant 1.000000e+00 : f32
    %52 = vector.broadcast %cst_26 : f32 to vector<16x128xf32>
    %53 = arith.addf %52, %51 : vector<16x128xf32>
    %54 = arith.mulf %15, %53 : vector<16x128xf32>
    %55 = arith.mulf %8, %54 : vector<16x128xf32>
    %c0_27 = arith.constant 0 : index
    %c0_28 = arith.constant 0 : index
    %56 = vector.load %arg10[%c0_27, %c0_28] : memref<16x32xf32, #tpu.memory_space<vmem>>, vector<16x32xf32>
    %c0_29 = arith.constant 0 : index
    %c0_30 = arith.constant 0 : index
    %57 = vector.load %arg7[%c0_29, %c0_30] : memref<128x32xf32, #tpu.memory_space<vmem>>, vector<128x32xf32>
    %cst_31 = arith.constant dense<0.000000e+00> : vector<16x32xf32>
    %58 = tpu.matmul %55, %57, %cst_31 {dimension_numbers = #tpu.dot_dimension_numbers<[1], [0], [0], [1], [0, 0, 1, 1], [], []>} : vector<16x128xf32>, vector<128x32xf32>, vector<16x32xf32> -> vector<16x32xf32>
    %59 = arith.addf %56, %58 : vector<16x32xf32>
    %c0_32 = arith.constant 0 : index
    %c0_33 = arith.constant 0 : index
    %60 = vector.load %arg10[%c0_32, %c0_33] : memref<16x32xf32, #tpu.memory_space<vmem>>, vector<16x32xf32>
    tpu.vector_store %arg10[%c0_32, %c0_33], %59 {strides = array<i32>} : memref<16x32xf32, #tpu.memory_space<vmem>>, vector<16x32xf32>,
    %c0_i32_34 = arith.constant 0 : i32
    %61 = arith.cmpi eq, %arg1, %c0_i32_34 : i32
    %62 = arith.extui %61 : i1 to i32
    %c0_i32_35 = arith.constant 0 : i32
    %63 = arith.cmpi ne, %62, %c0_i32_35 : i32
    scf.if %63 {
      %c0_36 = arith.constant 0 : index
      %c0_37 = arith.constant 0 : index
      %64 = vector.load %arg10[%c0_36, %c0_37] : memref<16x32xf32, #tpu.memory_space<vmem>>, vector<16x32xf32>
      %c0_38 = arith.constant 0 : index
      %c0_39 = arith.constant 0 : index
      %65 = vector.load %arg9[%c0_38, %c0_39] : memref<16x32xf32, #tpu.memory_space<vmem>>, vector<16x32xf32>
      tpu.vector_store %arg9[%c0_38, %c0_39], %64 {strides = array<i32>} : memref<16x32xf32, #tpu.memory_space<vmem>>, vector<16x32xf32>,
    } else {
    }
    return
  }
  func.func @transform_0(%arg0: i32, %arg1: i32) -> (i32, i32) {
    %c0_i32 = arith.constant 0 : i32
    %c0_i32_0 = arith.constant 0 : i32
    return %arg0, %c0_i32 : i32, i32
  }
  func.func @transform_1(%arg0: i32, %arg1: i32) -> (i32, i32) {
    %c0_i32 = arith.constant 0 : i32
    %c0_i32_0 = arith.constant 0 : i32
    return %c0_i32, %arg1 : i32, i32
  }
  func.func @transform_2(%arg0: i32, %arg1: i32) -> (i32, i32) {
    %c0_i32 = arith.constant 0 : i32
    %c0_i32_0 = arith.constant 0 : i32
    return %c0_i32, %arg1 : i32, i32
  }
  func.func @transform_3(%arg0: i32, %arg1: i32) -> (i32, i32) {
    %c0_i32 = arith.constant 0 : i32
    %c0_i32_0 = arith.constant 0 : i32
    return %c0_i32, %arg1 : i32, i32
  }
  func.func @transform_4(%arg0: i32, %arg1: i32) -> (i32, i32) {
    %c0_i32 = arith.constant 0 : i32
    %c0_i32_0 = arith.constant 0 : i32
    return %c0_i32, %arg1 : i32, i32
  }
  func.func @transform_5(%arg0: i32, %arg1: i32) -> (i32, i32) {
    %c0_i32 = arith.constant 0 : i32
    %c0_i32_0 = arith.constant 0 : i32
    return %arg1, %c0_i32 : i32, i32
  }
  func.func @transform_6(%arg0: i32, %arg1: i32) -> (i32, i32) {
    %c0_i32 = arith.constant 0 : i32
    %c0_i32_0 = arith.constant 0 : i32
    %c0_i32_1 = arith.constant 0 : i32
    return %c0_i32, %c0_i32_0 : i32, i32
  }
  func.func @transform_7(%arg0: i32, %arg1: i32) -> (i32, i32) {
    %c0_i32 = arith.constant 0 : i32
    %c0_i32_0 = arith.constant 0 : i32
    return %arg0, %c0_i32 : i32, i32
  }
}

</mosaic_0001>

<llo_original>
// kernel: tpu_custom_call.1
$region0: #{tpu_custom_call.1}
  #allocation0 [shape = 'u32[]', space=smem, size = 0x4, offset = 0x4, fixed_abs, tag = 'smem constant byte address 0x4 - core index']
  #allocation1 [shape = 'u32[72,128]{1,0:T(1,128)}', space=vmem, size = 0x9000, scoped, tag = 'internal scratch']
  #allocation2 [shape = 'f32[16,32]{1,0:T(8,128)}', space=vmem, size = 0x2000, scoped, tag = 'scratch operand']
  %s0 = inlined_call_operand.vmem [shape: f32[16,32], index: 0, kind: input, shape index: {}]
  %s1 = inlined_call_operand.vmem [shape: f32[32,128], index: 1, kind: input, shape index: {}]
  %s2 = inlined_call_operand.vmem [shape: f32[32,128], index: 2, kind: input, shape index: {}]
  %s3 = inlined_call_operand.vmem [shape: f32[1,128], index: 3, kind: input, shape index: {}]
  %s4 = inlined_call_operand.vmem [shape: f32[1,128], index: 4, kind: input, shape index: {}]
  %s5 = inlined_call_operand.vmem [shape: f32[128,32], index: 5, kind: input, shape index: {}]
  %s6 = inlined_call_operand.vmem [shape: f32[1,32], index: 6, kind: input, shape index: {}]
  %s7 = inlined_call_operand.hbm [shape: f32[16,32], index: 7, kind: output, shape index: {}]
  %s8 = sld [smem:[#allocation0]]
  $region46: #{tpu_custom_call.1} parent=0
    _
  %s10 = ssub.s32 1, %s8
  %s11 = scalar_select 0, %s10, %s8
  $region1: #{tpu_custom_call.1} parent=0
    #allocation3 [shape = 'u8[8192]{0}', space=vmem, size = 0x2000, scoped, tag = 'output window, operand 0, single buffered']
    #allocation4 [shape = 's32[1]{0}', space=sflag, size = 0x4, scoped, tag = 'scoped memory for tpu_custom_call.1']
    %12 = vsyncpa [#allocation4], 0
    // Predicated region
    $region2: #{tpu_custom_call.1} parent=1 // pred_check
      _
    $region3: #{tpu_custom_call.1} parent=1 // pred_check_branch
      %14 = sbr.rel (0) target = $region5
    $region4: #{tpu_custom_call.1} parent=1 // pred_region
      _
    $region5: #{tpu_custom_call.1} parent=1 // pred_fallthru
      _
    // Predicated region
    $region6: #{tpu_custom_call.1} parent=1 // pred_check
      _
    $region7: #{tpu_custom_call.1} parent=1 // pred_check_branch
      %16 = sbr.rel (0) target = $region9
    $region8: #{tpu_custom_call.1} parent=1 // pred_region
      _
    $region9: #{tpu_custom_call.1} parent=1 // pred_fallthru
      _
    // Predicated region
    $region10: #{tpu_custom_call.1} parent=1 // pred_check
      _
    $region11: #{tpu_custom_call.1} parent=1 // pred_check_branch
      %18 = sbr.rel (0) target = $region13
    $region12: #{tpu_custom_call.1} parent=1 // pred_region
      _
    $region13: #{tpu_custom_call.1} parent=1 // pred_fallthru
      _
    // Predicated region
    $region14: #{tpu_custom_call.1} parent=1 // pred_check
      _
    $region15: #{tpu_custom_call.1} parent=1 // pred_check_branch
      %20 = sbr.rel (0) target = $region17
    $region16: #{tpu_custom_call.1} parent=1 // pred_region
      _
    $region17: #{tpu_custom_call.1} parent=1 // pred_fallthru
      _
    // Predicated region
    $region18: #{tpu_custom_call.1} parent=1 // pred_check
      _
    $region19: #{tpu_custom_call.1} parent=1 // pred_check_branch
      %22 = sbr.rel (0) target = $region21
    $region20: #{tpu_custom_call.1} parent=1 // pred_region
      _
    $region21: #{tpu_custom_call.1} parent=1 // pred_fallthru
      _
    // Predicated region
    $region22: #{tpu_custom_call.1} parent=1 // pred_check
      _
    $region23: #{tpu_custom_call.1} parent=1 // pred_check_branch
      %24 = sbr.rel (0) target = $region25
    $region24: #{tpu_custom_call.1} parent=1 // pred_region
      _
    $region25: #{tpu_custom_call.1} parent=1 // pred_fallthru
      _
    // Predicated region
    $region26: #{tpu_custom_call.1} parent=1 // pred_check
      _
    $region27: #{tpu_custom_call.1} parent=1 // pred_check_branch
      %26 = sbr.rel (0) target = $region29
    $region28: #{tpu_custom_call.1} parent=1 // pred_region
      _
    $region29: #{tpu_custom_call.1} parent=1 // pred_fallthru
      _
    %p27 = scmp.eq.s32.totalorder 0, 0
    // Predicated region
    $region30: #{tpu_custom_call.1} parent=1 // pred_check
      %p28 = pneg %p27
    $region31: #{tpu_custom_call.1} parent=1 // pred_check_branch
      %30 = sbr.rel (%p28) target = $region33
    $region32: #{tpu_custom_call.1} parent=1 // pred_region
      %v31 = vld [vmem:[%s6] sm:$0x1]
      %v33 = vperm.slane %v31, 0
      %vm35 = vcmask 261120
      %36 = vst.msk [vmem:[#allocation2] sm:$0xff] %vm35, %v33
      %37 = vst.msk [vmem:[#allocation2 + $0x8] sm:$0xff] %vm35, %v33
    $region33: #{tpu_custom_call.1} parent=1 // pred_fallthru
      _
    %v38 = vld [vmem:[%s0] sm:$0xff]
    %v39 = vld [vmem:[%s0 + $0x8] sm:$0xff]
    %v40 = vld [vmem:[%s1] sm:$0xff]
    %v41 = vld [vmem:[%s1 + $0x8] sm:$0xff]
    %v42 = vld [vmem:[%s1 + $0x10] sm:$0xff]
    %v43 = vld [vmem:[%s1 + $0x18] sm:$0xff]
    %v44 = vld [vmem:[%s3] sm:$0x1]
    %v46 = vperm.slane %v44, 0
    %vm48 = vcmask 261120
    %v50 = vsel %vm48, %v38, 0
    %v53 = vsel %vm48, %v39, 0
    %55 = vmatpush.msra.mxu0 0.0
    %56 = vmatpush.msra.mxu0 0.0
    %57 = vmatpush.msra.mxu0 0.0
    %58 = vmatpush.msra.mxu0 0.0
    %59 = vmatpush.msra.mxu0 0.0
    %60 = vmatpush.msra.mxu0 0.0
    %61 = vmatpush.msra.mxu0 0.0
    %62 = vmatpush.msra.mxu0 0.0
    %63 = vmatpush.msra.mxu0 0.0
    %64 = vmatpush.msra.mxu0 0.0
    %65 = vmatpush.msra.mxu0 0.0
    %66 = vmatpush.msra.mxu0 0.0
    %67 = vmatpush.msra.mxu0 %v43
    %68 = vmatpush.msra.mxu0 %v42
    %69 = vmatpush.msra.mxu0 %v41
    %70 = vmatpush.msra.mxu0 %v40
    %71 = vmatmul.f32.gmra.mxu0 %v50
    %v72 = vpop.f32.mrf.mxu0
    %v73 = vadd.f32 %v46, %v72
    %74 = vmatmul.f32.gmra.mxu0 %v53
    %v75 = vpop.f32.mrf.mxu0
    %v76 = vadd.f32 %v46, %v75
    %77 = vdwg.mxu0
    %v78 = vld [vmem:[%s2] sm:$0xff]
    %v79 = vld [vmem:[%s2 + $0x8] sm:$0xff]
    %v80 = vld [vmem:[%s2 + $0x10] sm:$0xff]
    %v81 = vld [vmem:[%s2 + $0x18] sm:$0xff]
    %v82 = vld [vmem:[%s4] sm:$0x1]
    %v84 = vperm.slane %v82, 0
    %86 = vmatpush.msra.mxu0 0.0
    %87 = vmatpush.msra.mxu0 0.0
    %88 = vmatpush.msra.mxu0 0.0
    %89 = vmatpush.msra.mxu0 0.0
    %90 = vmatpush.msra.mxu0 0.0
    %91 = vmatpush.msra.mxu0 0.0
    %92 = vmatpush.msra.mxu0 0.0
    %93 = vmatpush.msra.mxu0 0.0
    %94 = vmatpush.msra.mxu0 0.0
    %95 = vmatpush.msra.mxu0 0.0
    %96 = vmatpush.msra.mxu0 0.0
    %97 = vmatpush.msra.mxu0 0.0
    %98 = vmatpush.msra.mxu0 %v81
    %99 = vmatpush.msra.mxu0 %v80
    %100 = vmatpush.msra.mxu0 %v79
    %101 = vmatpush.msra.mxu0 %v78
    %102 = vmatmul.f32.gmra.mxu0 %v50
    %v103 = vpop.f32.mrf.mxu0
    %v104 = vadd.f32 %v84, %v103
    %105 = vmatmul.f32.gmra.mxu0 %v53
    %v106 = vpop.f32.mrf.mxu0
    %v107 = vadd.f32 %v84, %v106
    %108 = vdwg.mxu0
    %v109 = vmul.f32 %v104, 0.5
    %v110 = vmul.f32 %v107, 0.5
    %v111 = vmul.f32 %v104, 0.70710677
    %v112 = vmul.f32 %v107, 0.70710677
    %vm113 = vcmp.ge.f32.partialorder %v111, 0.0
    %vm114 = vcmp.ge.f32.partialorder %v112, 0.0
    %v115 = vsel %vm113, 1.0, -1.0
    %v116 = vsel %vm114, 1.0, -1.0
    %v117 = vand.u32 2147483647, %v111
    %v118 = vand.u32 2147483647, %v112
    %v119 = vmul.f32 %v117, 0.3275911
    %v120 = vmul.f32 %v118, 0.3275911
    %v121 = vadd.f32 %v119, 1.0
    %v122 = vadd.f32 %v120, 1.0
    %v123 = vrcp.pop %v121
    %v124 = vmul.f32 %v121, %v123
    %v125 = vsub.f32 1.0, %v124
    %v126 = vmul.f32 %v123, %v125
    %v127 = vadd.f32 %v123, %v126
    %vm128 = vweird.f32 %v121
    %vm129 = vweird.f32 %v123
    %vm130 = vmor %vm128, %vm129
    %v131 = vsel %vm130, %v123, %v127
    %v132 = vand.u32 2147483647, %v121
    %vm133 = vcmp.eq.f32.partialorder %v132, 8.507059e+37
    %v134 = vand.u32 %v121, 2147483648
    %v135 = vor.u32 1.1754944e-38, %v134
    %v136 = vsel %vm133, %v135, %v131
    %v137 = vmul.f32 1.0, %v136
    %v138 = vrcp.pop %v122
    %v139 = vmul.f32 %v122, %v138
    %v140 = vsub.f32 1.0, %v139
    %v141 = vmul.f32 %v138, %v140
    %v142 = vadd.f32 %v138, %v141
    %vm143 = vweird.f32 %v122
    %vm144 = vweird.f32 %v138
    %vm145 = vmor %vm143, %vm144
    %v146 = vsel %vm145, %v138, %v142
    %v147 = vand.u32 2147483647, %v122
    %vm148 = vcmp.eq.f32.partialorder %v147, 8.507059e+37
    %v149 = vand.u32 %v122, 2147483648
    %v150 = vor.u32 1.1754944e-38, %v149
    %v151 = vsel %vm148, %v150, %v146
    %v152 = vmul.f32 1.0, %v151
    %v153 = vmul.f32 %v137, 1.0614054
    %v154 = vmul.f32 %v152, 1.0614054
    %v155 = vadd.f32 %v153, -1.4531521
    %v156 = vadd.f32 %v154, -1.4531521
    %v157 = vmul.f32 %v155, %v137
    %v158 = vmul.f32 %v156, %v152
    %v159 = vadd.f32 %v157, 1.4214138
    %v160 = vadd.f32 %v158, 1.4214138
    %v161 = vmul.f32 %v159, %v137
    %v162 = vmul.f32 %v160, %v152
    %v163 = vadd.f32 %v161, -0.28449672
    %v164 = vadd.f32 %v162, -0.28449672
    %v165 = vmul.f32 %v163, %v137
    %v166 = vmul.f32 %v164, %v152
    %v167 = vadd.f32 %v165, 0.2548296
    %v168 = vadd.f32 %v166, 0.2548296
    %v169 = vmul.f32 %v167, %v137
    %v170 = vmul.f32 %v168, %v152
    %v171 = vsub.f32 0.0, %v117
    %v172 = vsub.f32 0.0, %v118
    %v173 = vmul.f32 %v171, %v117
    %v174 = vmul.f32 %v172, %v118
    %v175 = vmul.f32 %v173, 1.442695
    %v176 = vpow.pop %v175
    %v177 = vmul.f32 %v174, 1.442695
    %v178 = vpow.pop %v177
    %v179 = vmul.f32 %v169, %v176
    %v180 = vmul.f32 %v170, %v178
    %v181 = vsub.f32 1.0, %v179
    %v182 = vsub.f32 1.0, %v180
    %v183 = vmul.f32 %v115, %v181
    %v184 = vmul.f32 %v116, %v182
    %v185 = vadd.f32 %v183, 1.0
    %v186 = vadd.f32 %v184, 1.0
    %v187 = vmul.f32 %v109, %v185
    %v188 = vmul.f32 %v110, %v186
    %v189 = vmul.f32 %v73, %v187
    %v190 = vmul.f32 %v76, %v188
    %v191 = vld [vmem:[#allocation2] sm:$0xff]
    %v192 = vld [vmem:[#allocation2 + $0x8] sm:$0xff]
    %v193 = vld [vmem:[%s5] sm:$0xff]
    %v194 = vld [vmem:[%s5 + $0x8] sm:$0xff]
    %v195 = vld [vmem:[%s5 + $0x10] sm:$0xff]
    %v196 = vld [vmem:[%s5 + $0x18] sm:$0xff]
    %v197 = vld [vmem:[%s5 + $0x20] sm:$0xff]
    %v198 = vld [vmem:[%s5 + $0x28] sm:$0xff]
    %v199 = vld [vmem:[%s5 + $0x30] sm:$0xff]
    %v200 = vld [vmem:[%s5 + $0x38] sm:$0xff]
    %v201 = vld [vmem:[%s5 + $0x40] sm:$0xff]
    %v202 = vld [vmem:[%s5 + $0x48] sm:$0xff]
    %v203 = vld [vmem:[%s5 + $0x50] sm:$0xff]
    %v204 = vld [vmem:[%s5 + $0x58] sm:$0xff]
    %v205 = vld [vmem:[%s5 + $0x60] sm:$0xff]
    %v206 = vld [vmem:[%s5 + $0x68] sm:$0xff]
    %v207 = vld [vmem:[%s5 + $0x70] sm:$0xff]
    %v208 = vld [vmem:[%s5 + $0x78] sm:$0xff]
    %209 = vmatpush.msra.mxu0 %v208
    %210 = vmatpush.msra.mxu0 %v207
    %211 = vmatpush.msra.mxu0 %v206
    %212 = vmatpush.msra.mxu0 %v205
    %213 = vmatpush.msra.mxu0 %v204
    %214 = vmatpush.msra.mxu0 %v203
    %215 = vmatpush.msra.mxu0 %v202
    %216 = vmatpush.msra.mxu0 %v201
    %217 = vmatpush.msra.mxu0 %v200
    %218 = vmatpush.msra.mxu0 %v199
    %219 = vmatpush.msra.mxu0 %v198
    %220 = vmatpush.msra.mxu0 %v197
    %221 = vmatpush.msra.mxu0 %v196
    %222 = vmatpush.msra.mxu0 %v195
    %223 = vmatpush.msra.mxu0 %v194
    %224 = vmatpush.msra.mxu0 %v193
    %225 = vmatmul.f32.gmra.mxu0 %v189
    %v226 = vpop.f32.mrf.mxu0
    %v227 = vadd.f32 0.0, %v226
    %228 = vmatmul.f32.gmra.mxu0 %v190
    %v229 = vpop.f32.mrf.mxu0
    %v230 = vadd.f32 0.0, %v229
    %231 = vdwg.mxu0
    %v232 = vadd.f32 %v191, %v227
    %v233 = vadd.f32 %v192, %v230
    %234 = vst.msk [vmem:[#allocation2] sm:$0xff] %vm48, %v232
    %235 = vst.msk [vmem:[#allocation2 + $0x8] sm:$0xff] %vm48, %v233
    // Predicated region
    $region34: #{tpu_custom_call.1} parent=1 // pred_check
      %p236 = pneg %p27
    $region35: #{tpu_custom_call.1} parent=1 // pred_check_branch
      %238 = sbr.rel (%p236) target = $region37
    $region36: #{tpu_custom_call.1} parent=1 // pred_region
      %v239 = vld [vmem:[#allocation2] sm:$0xff]
      %v240 = vld [vmem:[#allocation2 + $0x8] sm:$0xff]
      %241 = vst.msk [vmem:[#allocation3] sm:$0xff] %vm48, %v239
      %242 = vst.msk [vmem:[#allocation3 + $0x8] sm:$0xff] %vm48, %v240
    $region37: #{tpu_custom_call.1} parent=1 // pred_fallthru
      _
    // Predicated region
    $region38: #{tpu_custom_call.1} parent=1 // pred_check
      _
    $region39: #{tpu_custom_call.1} parent=1 // pred_check_branch
      %244 = sbr.rel (0) target = $region41
    $region40: #{tpu_custom_call.1} parent=1 // pred_region
      %246 = vsyncadd [#allocation4], 0
      %s247 = sshll.u32 [#allocation3], 4
      %s248 = int_to_ptr.vmem [resolvable:$true] %s247
      %s249 = sshll.u32 %s7, 4
      %s250 = int_to_ptr.hbm [resolvable:$true] %s249
      %255 = dma.vmem_to_hbm [thread:$0]  %s248, 256, %s250, [#allocation4], 128, 128, 8
    $region41: #{tpu_custom_call.1} parent=1 // pred_fallthru
      _
    // Predicated region
    $region42: #{tpu_custom_call.1} parent=1 // pred_check
      _
    $region43: #{tpu_custom_call.1} parent=1 // pred_check_branch
      %257 = sbr.rel (0) target = $region45
    $region44: #{tpu_custom_call.1} parent=1 // pred_region
      %259 = dma.done [#allocation4], 256
    $region45: #{tpu_custom_call.1} parent=1 // pred_fallthru
      _
    %260 = vsyncpa [#allocation4], 1

</llo_original>
